<compile_context>
chip_gen: v6e
topology: v6e:2x2x1
jax: 0.10.0
libtpu: 0.0.40
codegen_flags: <defaults>
</compile_context>

<pallas_src>
import functools

import jax
import jax.numpy as jnp
from jax.experimental import pallas as pl
from jax.experimental.pallas import tpu as pltpu


def _round_up(x, m):
    return ((x + m - 1) // m) * m


# ---------------------------------------------------------------------------
# Kernels
# ---------------------------------------------------------------------------

def _affine_kernel(x_ref, w_ref, b_ref, o_ref):
    """Dense fold: y = x @ W_eff + b_eff for one batch tile.

    x arrives f32 and is cast to bf16 *inside* the kernel (free VPU filler
    under the MXU) -- no extra host-side pad/cast HBM passes.
    """
    x = x_ref[...].astype(jnp.bfloat16)
    acc = jnp.dot(x, w_ref[...], preferred_element_type=jnp.float32)
    o_ref[...] = (acc + b_ref[...]).astype(o_ref.dtype)


def _factored_kernel(x_ref, we_ref, be_ref, wd_ref, bd_ref, o_ref):
    """Factored fold: y = (x @ W_enc + b_enc) @ W_dec + b_dec.

    The hidden activation lives entirely on-chip (vregs/VMEM) -- no HBM
    round-trip between the encoder and decoder matmuls.
    """
    x = x_ref[...].astype(jnp.bfloat16)
    h = jnp.dot(x, we_ref[...], preferred_element_type=jnp.float32) + be_ref[...]
    y = jnp.dot(h.astype(jnp.bfloat16), wd_ref[...],
                preferred_element_type=jnp.float32) + bd_ref[...]
    o_ref[...] = y.astype(o_ref.dtype)


# ---------------------------------------------------------------------------
# One-time weight preparation (hoisted out of the per-forward path)
# ---------------------------------------------------------------------------

def _fold(weights, biases):
    """Fold (((x@W0+b0)@W1+b1)...) into a single (W_eff, b_eff)."""
    w_eff, b_eff = weights[0], biases[0]
    for w, b in zip(weights[1:], biases[1:]):
        b_eff = b_eff @ w + b
        w_eff = w_eff @ w
    return w_eff, b_eff


def prepare_autoencoder_params(weights, biases):
    """Fold / pad / cast the Linear chain ONCE per weight update.

    The fold is exact ONLY because AutoEncoder.createActivation() has no
    return statement, so no activation module is ever inserted and forward()
    is purely affine.  If that upstream bug were fixed, this fusion would be
    silently wrong -- hence the explicit guard flag.
    """
    ACTIVATION_FREE_CHAIN = True  # createActivation() never returns a module
    assert ACTIVATION_FREE_CHAIN, "fold only valid for an activation-free chain"

    n = len(weights)
    assert n == len(biases) and n % 2 == 0, "encoder/decoder must be Linear pairs"
    n_enc = n // 2
    w_enc, b_enc = _fold(weights[:n_enc], biases[:n_enc])   # (F, H), (H,)
    w_dec, b_dec = _fold(weights[n_enc:], biases[n_enc:])   # (H, F), (F,)
    F, H = w_enc.shape
    H_pad = max(128, _round_up(H, 128))   # lane-dense hidden width

    if F <= 2 * H_pad:
        # Narrow input: a dense FxF fold costs no more than the factored pair.
        w_eff = (w_enc @ w_dec).astype(jnp.bfloat16)
        b_eff = (b_enc @ w_dec + b_dec).astype(jnp.float32).reshape(1, F)
        return {"mode": "full", "F": F, "H_pad": F, "w": w_eff, "b": b_eff}

    # Wide input, narrow bottleneck: keep encoder/decoder factored so the MXU
    # work is ~4*B*F*H_pad (not 2*B*F^2) and resident weights are 2*F*H_pad
    # bf16 bytes (not F^2) -- decisive on v7x's 64 MiB VMEM.
    we = jnp.zeros((F, H_pad), jnp.float32).at[:, :H].set(w_enc).astype(jnp.bfloat16)
    be = jnp.zeros((1, H_pad), jnp.float32).at[0, :H].set(b_enc)
    wd = jnp.zeros((H_pad, F), jnp.float32).at[:H, :].set(w_dec).astype(jnp.bfloat16)
    bd = jnp.asarray(b_dec, jnp.float32).reshape(1, F)
    return {"mode": "factored", "F": F, "H_pad": H_pad,
            "we": we, "be": be, "wd": wd, "bd": bd}


# ---------------------------------------------------------------------------
# Forward pass
# ---------------------------------------------------------------------------

def _vmem_budget_bytes():
    """Generation-aware usable VMEM (v5e/v6e ~96 MiB, v7x ~48 MiB)."""
    try:
        cap = int(pltpu.get_tpu_info().vmem_capacity_bytes)
    except Exception:
        cap = 64 * 2**20           # conservative fallback: v7x per-core VMEM
    return (cap * 3) // 4          # ~25% headroom for compiler scratch


def _pick_tile_b(B, F, weight_bytes, budget, target=512):
    """Few, large batch tiles: per-step overhead ~0.35us; 512+-row tiles reach
    85%+ of HBM roofline.  Whole batch in one block when it fits (demo case).
    With large B the default 512-row tile also yields plenty of grid steps per
    TensorCore for v7x 'parallel' sharding + double-buffering."""
    per_row = 2 * (F * 4) + 2 * (F * 4)        # double-buffered f32 x + f32 out
    avail = budget - 2 * weight_bytes - (2 << 20)
    max_rows = max(8, (avail // per_row) // 8 * 8) if avail > 0 else 8
    tile_b = max(8, min(target, max_rows))
    b8 = _round_up(B, 8)
    return b8 if b8 <= tile_b else tile_b


def autoencoder_forward(x, params, *, tile_b=None):
    """Fused AutoEncoder.forward(): x (B, numinp) f32 -> (B, numinp) f32."""
    B, F = x.shape
    assert F == params["F"]
    mode = params["mode"]
    budget = _vmem_budget_bytes()

    if mode == "full":
        weight_bytes = params["w"].size * 2 + params["b"].size * 4
    else:
        weight_bytes = (params["we"].size * 2 + params["wd"].size * 2
                        + params["be"].size * 4 + params["bd"].size * 4)
    # TODO(synk): for extreme numinp where even the factored weights exceed the
    # VMEM budget, add an (i, n, k) grid that streams W tiles with an f32
    # accumulator scratch instead of keeping W resident.

    if tile_b is None:
        tile_b = _pick_tile_b(B, F, weight_bytes, budget)
    tile_b = max(8, _round_up(tile_b, 8))

    B_pad = _round_up(B, tile_b)
    if B_pad != B:                       # fuses under jit; demo needs no pad
        x = jnp.pad(x, ((0, B_pad - B), (0, 0)))
    grid = (B_pad // tile_b,)

    # VMEM limit from the actual footprint (resident weights assumed
    # double-buffered, pipelined x/out tiles, on-chip intermediate), clipped to
    # the per-generation budget -- never a fixed cap below the real footprint.
    footprint = (2 * weight_bytes
                 + 2 * (tile_b * F * 4)              # x tiles (f32, 2 bufs)
                 + 2 * (tile_b * F * 4)              # out tiles (f32, 2 bufs)
                 + tile_b * params["H_pad"] * 4)     # on-chip intermediate
    vmem_limit = int(min(budget, max(32 * 2**20, (footprint * 3) // 2)))

    cparams = pltpu.CompilerParams(
        dimension_semantics=("parallel",),           # batch axis -> both TCs
        vmem_limit_bytes=vmem_limit,
    )

    x_spec = pl.BlockSpec((tile_b, F), lambda i: (i, 0))
    out_spec = pl.BlockSpec((tile_b, F), lambda i: (i, 0))
    out_shape = jax.ShapeDtypeStruct((B_pad, F), x.dtype)

    if mode == "full":
        out = pl.pallas_call(
            _affine_kernel,
            out_shape=out_shape,
            grid=grid,
            in_specs=[
                x_spec,
                pl.BlockSpec((F, F), lambda i: (0, 0)),   # W_eff: VMEM-resident
                pl.BlockSpec((1, F), lambda i: (0, 0)),   # b_eff: VMEM-resident
            ],
            out_specs=out_spec,
            compiler_params=cparams,
        )(x, params["w"], params["b"])
    else:
        H_pad = params["H_pad"]
        out = pl.pallas_call(
            _factored_kernel,
            out_shape=out_shape,
            grid=grid,
            in_specs=[
                x_spec,
                pl.BlockSpec((F, H_pad), lambda i: (0, 0)),   # W_enc resident
                pl.BlockSpec((1, H_pad), lambda i: (0, 0)),   # b_enc
                pl.BlockSpec((H_pad, F), lambda i: (0, 0)),   # W_dec resident
                pl.BlockSpec((1, F), lambda i: (0, 0)),       # b_dec
            ],
            out_specs=out_spec,
            compiler_params=cparams,
        )(x, params["we"], params["be"], params["wd"], params["bd"])

    return out[:B] if B_pad != B else out


# ---------------------------------------------------------------------------
# Parameter construction mirroring buildModel(), and a per-layer reference
# ---------------------------------------------------------------------------

def init_linear_params(key, in_dim, out_dim):
    """Deterministic init mimicking torch.nn.Linear default (uniform +/- 1/sqrt(in))."""
    kw, kb = jax.random.split(key)
    bound = 1.0 / jnp.sqrt(jnp.float32(in_dim))
    w = jax.random.uniform(kw, (out_dim, in_dim), jnp.float32, -bound, bound)
    b = jax.random.uniform(kb, (out_dim,), jnp.float32, -bound, bound)
    return w.T, b  # (in, out) layout for `x @ W`


def build_autoencoder_params(key, numinp, num_hidden):
    """Replicates buildModel(): encoder numinp->h1->...->hL, decoder hL->...->numinp."""
    layer_dims = []
    in_size = numinp
    for h in num_hidden:                          # encoder
        layer_dims.append((in_size, h))
        in_size = h
    for i in reversed(range(len(num_hidden))):    # decoder
        in_size = num_hidden[i]
        out_size = num_hidden[i - 1] if i > 0 else numinp
        layer_dims.append((in_size, out_size))

    weights, biases = [], []
    for (din, dout) in layer_dims:
        key, sub = jax.random.split(key)
        w, b = init_linear_params(sub, din, dout)
        weights.append(w)   # (in, out)
        biases.append(b)    # (out,)
    return weights, biases


def reference_forward(x, weights, biases):
    """Per-layer f32 reference matching the module's forward() exactly."""
    y = x
    for w, b in zip(weights, biases):
        y = y @ w + b
    return y


if __name__ == "__main__":
    key = jax.random.PRNGKey(0)

    # --- Config 1: module-typical small config -> dense-fold kernel path ----
    batch, numinp, num_hidden = 256, 32, [16, 8]
    key, kx, kp = jax.random.split(key, 3)
    x = jax.random.normal(kx, (batch, numinp), jnp.float32)
    weights, biases = build_autoencoder_params(kp, numinp, num_hidden)

    params = prepare_autoencoder_params(weights, biases)   # one-time, hoisted
    assert params["mode"] == "full"
    fwd = jax.jit(functools.partial(autoencoder_forward, params=params))
    y = jax.block_until_ready(fwd(x))                      # grid=(1,), single 256-row tile

    y_ref = reference_forward(x, weights, biases)
    assert y.shape == (batch, numinp)
    assert jnp.allclose(y, y_ref, atol=5e-2, rtol=5e-2), (
        f"dense-fold mismatch (max abs err {float(jnp.max(jnp.abs(y - y_ref)))})")

    # --- Config 2: wide input, narrow bottleneck -> factored kernel path ----
    batch2, numinp2, num_hidden2 = 64, 384, [64, 16]
    key, kx2, kp2 = jax.random.split(key, 3)
    x2 = jax.random.normal(kx2, (batch2, numinp2), jnp.float32)
    weights2, biases2 = build_autoencoder_params(kp2, numinp2, num_hidden2)

    params2 = prepare_autoencoder_params(weights2, biases2)
    assert params2["mode"] == "factored"
    fwd2 = jax.jit(functools.partial(autoencoder_forward, params=params2))
    y2 = jax.block_until_ready(fwd2(x2))

    y2_ref = reference_forward(x2, weights2, biases2)
    assert y2.shape == (batch2, numinp2)
    assert jnp.allclose(y2, y2_ref, atol=5e-2, rtol=5e-2), (
        f"factored-fold mismatch (max abs err {float(jnp.max(jnp.abs(y2 - y2_ref)))})")

    # TODO(synk): training loop (Adam/SGD, MSE/CE), config-file parsing and
    # data/model file I/O (trainAe/encode/getParams) have no Pallas equivalent
    # and are intentionally not implemented (forward only).
    print("KERNEL_OK")
</pallas_src>

<mosaic_0001>
module attributes {stable_mosaic.version = 11 : i64} {
  func.func @_affine_kernel(%arg0: i32, %arg1: memref<256x32xf32, #tpu.memory_space<vmem>>, %arg2: memref<32x32xbf16, #tpu.memory_space<vmem>>, %arg3: memref<1x32xf32, #tpu.memory_space<vmem>>, %arg4: memref<256x32xf32, #tpu.memory_space<vmem>>) attributes {dimension_semantics = [#tpu.dimension_semantics<parallel>], iteration_bounds = array<i64: 1>, scalar_prefetch = 0 : i64, scratch_operands = 0 : i64, tpu.core_type = #tpu.core_type<tc>, window_params = [{transform_indices = @transform_0, window_bounds = array<i64: 256, 32>}, {pipeline_mode = #tpu.pipeline_mode<synchronous>, transform_indices = @transform_1, window_bounds = array<i64: 32, 32>}, {pipeline_mode = #tpu.pipeline_mode<synchronous>, transform_indices = @transform_2, window_bounds = array<i64: 1, 32>}, {transform_indices = @transform_3, window_bounds = array<i64: 256, 32>}]} {
    %c0 = arith.constant 0 : index
    %c0_0 = arith.constant 0 : index
    %0 = vector.load %arg1[%c0, %c0_0] : memref<256x32xf32, #tpu.memory_space<vmem>>, vector<256x32xf32>
    %1 = arith.truncf %0 : vector<256x32xf32> to vector<256x32xbf16>
    %c0_1 = arith.constant 0 : index
    %c0_2 = arith.constant 0 : index
    %2 = vector.load %arg2[%c0_1, %c0_2] : memref<32x32xbf16, #tpu.memory_space<vmem>>, vector<32x32xbf16>
    %cst = arith.constant dense<0.000000e+00> : vector<256x32xf32>
    %3 = tpu.matmul %1, %2, %cst {dimension_numbers = #tpu.dot_dimension_numbers<[1], [0], [0], [1], [0, 0, 1, 1], [], []>} : vector<256x32xbf16>, vector<32x32xbf16>, vector<256x32xf32> -> vector<256x32xf32>
    %c0_3 = arith.constant 0 : index
    %c0_4 = arith.constant 0 : index
    %4 = vector.load %arg3[%c0_3, %c0_4] : memref<1x32xf32, #tpu.memory_space<vmem>>, vector<1x32xf32>
    %5 = vector.broadcast %4 : vector<1x32xf32> to vector<256x32xf32>
    %6 = arith.addf %3, %5 : vector<256x32xf32>
    %c0_5 = arith.constant 0 : index
    %c0_6 = arith.constant 0 : index
    %7 = vector.load %arg4[%c0_5, %c0_6] : memref<256x32xf32, #tpu.memory_space<vmem>>, vector<256x32xf32>
    tpu.vector_store %arg4[%c0_5, %c0_6], %6 {strides = array<i32>} : memref<256x32xf32, #tpu.memory_space<vmem>>, vector<256x32xf32>,
    return
  }
  func.func @transform_0(%arg0: i32) -> (i32, i32) {
    %c0_i32 = arith.constant 0 : i32
    %c0_i32_0 = arith.constant 0 : i32
    return %arg0, %c0_i32 : i32, i32
  }
  func.func @transform_1(%arg0: i32) -> (i32, i32) {
    %c0_i32 = arith.constant 0 : i32
    %c0_i32_0 = arith.constant 0 : i32
    %c0_i32_1 = arith.constant 0 : i32
    return %c0_i32, %c0_i32_0 : i32, i32
  }
  func.func @transform_2(%arg0: i32) -> (i32, i32) {
    %c0_i32 = arith.constant 0 : i32
    %c0_i32_0 = arith.constant 0 : i32
    %c0_i32_1 = arith.constant 0 : i32
    return %c0_i32, %c0_i32_0 : i32, i32
  }
  func.func @transform_3(%arg0: i32) -> (i32, i32) {
    %c0_i32 = arith.constant 0 : i32
    %c0_i32_0 = arith.constant 0 : i32
    return %arg0, %c0_i32 : i32, i32
  }
}

</mosaic_0001>

<llo_original>
// kernel: autoencoder_forward.1
$region0: #{autoencoder_forward.1}
  #allocation0 [shape = 'u32[]', space=smem, size = 0x4, offset = 0x4, fixed_abs, tag = 'smem constant byte address 0x4 - core index']
  #allocation1 [shape = 'u32[144,128]{1,0:T(1,128)}', space=vmem, size = 0x12000, scoped, tag = 'internal scratch']
  %s0 = inlined_call_operand.vmem [shape: f32[256,32], index: 0, kind: input, shape index: {}]
  %s1 = inlined_call_operand.vmem [shape: bf16[32,32], index: 1, kind: input, shape index: {}]
  %s2 = inlined_call_operand.vmem [shape: f32[1,32], index: 2, kind: input, shape index: {}]
  %s3 = inlined_call_operand.vmem [shape: f32[256,32], index: 3, kind: output, shape index: {}]
  %s4 = sld [smem:[#allocation0]]
  $region22: #{autoencoder_forward.1} parent=0
    _
  %s6 = ssub.s32 1, %s4
  %s7 = scalar_select 0, %s6, %s4
  // Predicated region
  $region2: #{autoencoder_forward.1} parent=0 // pred_check
    _
  $region3: #{autoencoder_forward.1} parent=0 // pred_check_branch
    %9 = sbr.rel (0) target = $region5
  $region4: #{autoencoder_forward.1} parent=0 // pred_region
    _
  $region5: #{autoencoder_forward.1} parent=0 // pred_fallthru
    _
  // Predicated region
  $region6: #{autoencoder_forward.1} parent=0 // pred_check
    _
  $region7: #{autoencoder_forward.1} parent=0 // pred_check_branch
    %11 = sbr.rel (0) target = $region9
  $region8: #{autoencoder_forward.1} parent=0 // pred_region
    _
  $region9: #{autoencoder_forward.1} parent=0 // pred_fallthru
    _
  // Predicated region
  $region10: #{autoencoder_forward.1} parent=0 // pred_check
    _
  $region11: #{autoencoder_forward.1} parent=0 // pred_check_branch
    %13 = sbr.rel (0) target = $region13
  $region12: #{autoencoder_forward.1} parent=0 // pred_region
    _
  $region13: #{autoencoder_forward.1} parent=0 // pred_fallthru
    _
  %v15 = vld [vmem:[%s0] sm:$0xff]
  %v16 = vld [vmem:[%s0 + $0x8] sm:$0xff]
  %v17 = vld [vmem:[%s0 + $0x10] sm:$0xff]
  %v18 = vld [vmem:[%s0 + $0x18] sm:$0xff]
  %v19 = vld [vmem:[%s0 + $0x20] sm:$0xff]
  %v20 = vld [vmem:[%s0 + $0x28] sm:$0xff]
  %v21 = vld [vmem:[%s0 + $0x30] sm:$0xff]
  %v22 = vld [vmem:[%s0 + $0x38] sm:$0xff]
  %v23 = vld [vmem:[%s0 + $0x40] sm:$0xff]
  %v24 = vld [vmem:[%s0 + $0x48] sm:$0xff]
  %v25 = vld [vmem:[%s0 + $0x50] sm:$0xff]
  %v26 = vld [vmem:[%s0 + $0x58] sm:$0xff]
  %v27 = vld [vmem:[%s0 + $0x60] sm:$0xff]
  %v28 = vld [vmem:[%s0 + $0x68] sm:$0xff]
  %v29 = vld [vmem:[%s0 + $0x70] sm:$0xff]
  %v30 = vld [vmem:[%s0 + $0x78] sm:$0xff]
  %v31 = vld [vmem:[%s0 + $0x80] sm:$0xff]
  %v32 = vld [vmem:[%s0 + $0x88] sm:$0xff]
  %v33 = vld [vmem:[%s0 + $0x90] sm:$0xff]
  %v34 = vld [vmem:[%s0 + $0x98] sm:$0xff]
  %v35 = vld [vmem:[%s0 + $0xa0] sm:$0xff]
  %v36 = vld [vmem:[%s0 + $0xa8] sm:$0xff]
  %v37 = vld [vmem:[%s0 + $0xb0] sm:$0xff]
  %v38 = vld [vmem:[%s0 + $0xb8] sm:$0xff]
  %v39 = vld [vmem:[%s0 + $0xc0] sm:$0xff]
  %v40 = vld [vmem:[%s0 + $0xc8] sm:$0xff]
  %v41 = vld [vmem:[%s0 + $0xd0] sm:$0xff]
  %v42 = vld [vmem:[%s0 + $0xd8] sm:$0xff]
  %v43 = vld [vmem:[%s0 + $0xe0] sm:$0xff]
  %v44 = vld [vmem:[%s0 + $0xe8] sm:$0xff]
  %v45 = vld [vmem:[%s0 + $0xf0] sm:$0xff]
  %v46 = vld [vmem:[%s0 + $0xf8] sm:$0xff]
  %v47 = vpack.c.bf16 %v16, %v15
  %v48 = vpack.c.bf16 %v18, %v17
  %v49 = vpack.c.bf16 %v20, %v19
  %v50 = vpack.c.bf16 %v22, %v21
  %v51 = vpack.c.bf16 %v24, %v23
  %v52 = vpack.c.bf16 %v26, %v25
  %v53 = vpack.c.bf16 %v28, %v27
  %v54 = vpack.c.bf16 %v30, %v29
  %v55 = vpack.c.bf16 %v32, %v31
  %v56 = vpack.c.bf16 %v34, %v33
  %v57 = vpack.c.bf16 %v36, %v35
  %v58 = vpack.c.bf16 %v38, %v37
  %v59 = vpack.c.bf16 %v40, %v39
  %v60 = vpack.c.bf16 %v42, %v41
  %v61 = vpack.c.bf16 %v44, %v43
  %v62 = vpack.c.bf16 %v46, %v45
  %v63 = vld [vmem:[%s1] sm:$0xf]
  %v64 = vld [vmem:[%s1 + $0x4] sm:$0xf]
  %v65 = vld [vmem:[%s1 + $0x8] sm:$0xf]
  %v66 = vld [vmem:[%s1 + $0xc] sm:$0xf]
  %v67 = vld [vmem:[%s2] sm:$0x1]
  %v69 = vlaneseq
  %v70 = vshrl.u32 %v69, 7
  %v71 = vsub.s32 0, %v70
  %v72 = vrot.slane %v67, %v71
  %v78 = vunpack.c.l.b16 %v63
  %v79 = vunpack.c.l.b16 %v64
  %v80 = vunpack.c.l.b16 %v65
  %v81 = vunpack.c.l.b16 %v66
  %v82 = vpack.c.b16 %v79, %v78
  %v83 = vpack.c.b16 %v81, %v80
  %vm86 = vcmask 261120
  %v88 = vsel %vm86, %v47, 0
  %v91 = vsel %vm86, %v48, 0
  %v94 = vsel %vm86, %v49, 0
  %v97 = vsel %vm86, %v50, 0
  %v100 = vsel %vm86, %v51, 0
  %v103 = vsel %vm86, %v52, 0
  %v106 = vsel %vm86, %v53, 0
  %v109 = vsel %vm86, %v54, 0
  %v112 = vsel %vm86, %v55, 0
  %v115 = vsel %vm86, %v56, 0
  %v118 = vsel %vm86, %v57, 0
  %v121 = vsel %vm86, %v58, 0
  %v124 = vsel %vm86, %v59, 0
  %v127 = vsel %vm86, %v60, 0
  %v130 = vsel %vm86, %v61, 0
  %v133 = vsel %vm86, %v62, 0
  %135 = vmatprep.subr.bf16.mxu0 0
  %136 = vmatpush1.bf16.msra.mxu0 0
  %137 = vmatprep.subr.bf16.mxu0 0
  %138 = vmatpush1.bf16.msra.mxu0 0
  %139 = vmatprep.subr.bf16.mxu0 0
  %140 = vmatpush1.bf16.msra.mxu0 0
  %141 = vmatprep.subr.bf16.mxu0 0
  %142 = vmatpush1.bf16.msra.mxu0 0
  %143 = vmatprep.subr.bf16.mxu0 0
  %144 = vmatpush1.bf16.msra.mxu0 0
  %145 = vmatprep.subr.bf16.mxu0 0
  %146 = vmatpush1.bf16.msra.mxu0 0
  %147 = vmatprep.subr.bf16.mxu0 0
  %148 = vmatpush1.bf16.msra.mxu0 %v83
  %149 = vmatprep.subr.bf16.mxu0 0
  %150 = vmatpush1.bf16.msra.mxu0 %v82
  %151 = vmatprep.subr.bf16.mxu0 0
  %152 = vmatpush2.bf16.msra.mxu0 0
  %153 = vmatprep.subr.bf16.mxu0 0
  %154 = vmatpush2.bf16.msra.mxu0 0
  %155 = vmatprep.subr.bf16.mxu0 0
  %156 = vmatpush2.bf16.msra.mxu0 0
  %157 = vmatprep.subr.bf16.mxu0 0
  %158 = vmatpush2.bf16.msra.mxu0 0
  %159 = vmatprep.subr.bf16.mxu0 0
  %160 = vmatpush2.bf16.msra.mxu0 0
  %161 = vmatprep.subr.bf16.mxu0 0
  %162 = vmatpush2.bf16.msra.mxu0 0
  %163 = vmatprep.subr.bf16.mxu0 0
  %164 = vmatpush2.bf16.msra.mxu0 0
  %165 = vmatprep.subr.bf16.mxu0 0
  %166 = vmatpush2.bf16.msra.mxu0 0
  %167 = vmatprep.mubr.bf16.mxu0 0
  %168 = vmatmul.mubr.bf16.gmra.mxu0 %v88
  %v169 = vpop.f32.mrf.mxu0
  %v170 = vadd.f32 %v72, %v169
  %v171 = vpop.f32.mrf.mxu0
  %v172 = vpop.f32.mrf.mxu0
  %v173 = vadd.f32 %v72, %v172
  %v174 = vpop.f32.mrf.mxu0
  %175 = vmatprep.mubr.bf16.mxu0 0
  %176 = vmatmul.mubr.bf16.gmra.mxu0 %v91
  %v177 = vpop.f32.mrf.mxu0
  %v178 = vadd.f32 %v72, %v177
  %v179 = vpop.f32.mrf.mxu0
  %v180 = vpop.f32.mrf.mxu0
  %v181 = vadd.f32 %v72, %v180
  %v182 = vpop.f32.mrf.mxu0
  %183 = vmatprep.mubr.bf16.mxu0 0
  %184 = vmatmul.mubr.bf16.gmra.mxu0 %v94
  %v185 = vpop.f32.mrf.mxu0
  %v186 = vadd.f32 %v72, %v185
  %v187 = vpop.f32.mrf.mxu0
  %v188 = vpop.f32.mrf.mxu0
  %v189 = vadd.f32 %v72, %v188
  %v190 = vpop.f32.mrf.mxu0
  %191 = vmatprep.mubr.bf16.mxu0 0
  %192 = vmatmul.mubr.bf16.gmra.mxu0 %v97
  %v193 = vpop.f32.mrf.mxu0
  %v194 = vadd.f32 %v72, %v193
  %v195 = vpop.f32.mrf.mxu0
  %v196 = vpop.f32.mrf.mxu0
  %v197 = vadd.f32 %v72, %v196
  %v198 = vpop.f32.mrf.mxu0
  %199 = vmatprep.mubr.bf16.mxu0 0
  %200 = vmatmul.mubr.bf16.gmra.mxu0 %v100
  %v201 = vpop.f32.mrf.mxu0
  %v202 = vadd.f32 %v72, %v201
  %v203 = vpop.f32.mrf.mxu0
  %v204 = vpop.f32.mrf.mxu0
  %v205 = vadd.f32 %v72, %v204
  %v206 = vpop.f32.mrf.mxu0
  %207 = vmatprep.mubr.bf16.mxu0 0
  %208 = vmatmul.mubr.bf16.gmra.mxu0 %v103
  %v209 = vpop.f32.mrf.mxu0
  %v210 = vadd.f32 %v72, %v209
  %v211 = vpop.f32.mrf.mxu0
  %v212 = vpop.f32.mrf.mxu0
  %v213 = vadd.f32 %v72, %v212
  %v214 = vpop.f32.mrf.mxu0
  %215 = vmatprep.mubr.bf16.mxu0 0
  %216 = vmatmul.mubr.bf16.gmra.mxu0 %v106
  %v217 = vpop.f32.mrf.mxu0
  %v218 = vadd.f32 %v72, %v217
  %v219 = vpop.f32.mrf.mxu0
  %v220 = vpop.f32.mrf.mxu0
  %v221 = vadd.f32 %v72, %v220
  %v222 = vpop.f32.mrf.mxu0
  %223 = vmatprep.mubr.bf16.mxu0 0
  %224 = vmatmul.mubr.bf16.gmra.mxu0 %v109
  %v225 = vpop.f32.mrf.mxu0
  %v226 = vadd.f32 %v72, %v225
  %v227 = vpop.f32.mrf.mxu0
  %v228 = vpop.f32.mrf.mxu0
  %v229 = vadd.f32 %v72, %v228
  %v230 = vpop.f32.mrf.mxu0
  %231 = vmatprep.mubr.bf16.mxu0 0
  %232 = vmatmul.mubr.bf16.gmra.mxu0 %v112
  %v233 = vpop.f32.mrf.mxu0
  %v234 = vadd.f32 %v72, %v233
  %v235 = vpop.f32.mrf.mxu0
  %v236 = vpop.f32.mrf.mxu0
  %v237 = vadd.f32 %v72, %v236
  %v238 = vpop.f32.mrf.mxu0
  %239 = vmatprep.mubr.bf16.mxu0 0
  %240 = vmatmul.mubr.bf16.gmra.mxu0 %v115
  %v241 = vpop.f32.mrf.mxu0
  %v242 = vadd.f32 %v72, %v241
  %v243 = vpop.f32.mrf.mxu0
  %v244 = vpop.f32.mrf.mxu0
  %v245 = vadd.f32 %v72, %v244
  %v246 = vpop.f32.mrf.mxu0
  %247 = vmatprep.mubr.bf16.mxu0 0
  %248 = vmatmul.mubr.bf16.gmra.mxu0 %v118
  %v249 = vpop.f32.mrf.mxu0
  %v250 = vadd.f32 %v72, %v249
  %v251 = vpop.f32.mrf.mxu0
  %v252 = vpop.f32.mrf.mxu0
  %v253 = vadd.f32 %v72, %v252
  %v254 = vpop.f32.mrf.mxu0
  %255 = vmatprep.mubr.bf16.mxu0 0
  %256 = vmatmul.mubr.bf16.gmra.mxu0 %v121
  %v257 = vpop.f32.mrf.mxu0
  %v258 = vadd.f32 %v72, %v257
  %v259 = vpop.f32.mrf.mxu0
  %v260 = vpop.f32.mrf.mxu0
  %v261 = vadd.f32 %v72, %v260
  %v262 = vpop.f32.mrf.mxu0
  %263 = vmatprep.mubr.bf16.mxu0 0
  %264 = vmatmul.mubr.bf16.gmra.mxu0 %v124
  %v265 = vpop.f32.mrf.mxu0
  %v266 = vadd.f32 %v72, %v265
  %v267 = vpop.f32.mrf.mxu0
  %v268 = vpop.f32.mrf.mxu0
  %v269 = vadd.f32 %v72, %v268
  %v270 = vpop.f32.mrf.mxu0
  %271 = vmatprep.mubr.bf16.mxu0 0
  %272 = vmatmul.mubr.bf16.gmra.mxu0 %v127
  %v273 = vpop.f32.mrf.mxu0
  %v274 = vadd.f32 %v72, %v273
  %v275 = vpop.f32.mrf.mxu0
  %v276 = vpop.f32.mrf.mxu0
  %v277 = vadd.f32 %v72, %v276
  %v278 = vpop.f32.mrf.mxu0
  %279 = vmatprep.mubr.bf16.mxu0 0
  %280 = vmatmul.mubr.bf16.gmra.mxu0 %v130
  %v281 = vpop.f32.mrf.mxu0
  %v282 = vadd.f32 %v72, %v281
  %v283 = vpop.f32.mrf.mxu0
  %v284 = vpop.f32.mrf.mxu0
  %v285 = vadd.f32 %v72, %v284
  %v286 = vpop.f32.mrf.mxu0
  %287 = vmatprep.mubr.bf16.mxu0 0
  %288 = vmatmul.mubr.bf16.gmra.mxu0 %v133
  %v289 = vpop.f32.mrf.mxu0
  %v290 = vadd.f32 %v72, %v289
  %v291 = vpop.f32.mrf.mxu0
  %v292 = vpop.f32.mrf.mxu0
  %v293 = vadd.f32 %v72, %v292
  %v294 = vpop.f32.mrf.mxu0
  %295 = vdwg.mxu0
  %296 = vst.msk [vmem:[%s3] sm:$0xff] %vm86, %v170
  %297 = vst.msk [vmem:[%s3 + $0x8] sm:$0xff] %vm86, %v173
  %298 = vst.msk [vmem:[%s3 + $0x10] sm:$0xff] %vm86, %v178
  %299 = vst.msk [vmem:[%s3 + $0x18] sm:$0xff] %vm86, %v181
  %300 = vst.msk [vmem:[%s3 + $0x20] sm:$0xff] %vm86, %v186
  %301 = vst.msk [vmem:[%s3 + $0x28] sm:$0xff] %vm86, %v189
  %302 = vst.msk [vmem:[%s3 + $0x30] sm:$0xff] %vm86, %v194
  %303 = vst.msk [vmem:[%s3 + $0x38] sm:$0xff] %vm86, %v197
  %304 = vst.msk [vmem:[%s3 + $0x40] sm:$0xff] %vm86, %v202
  %305 = vst.msk [vmem:[%s3 + $0x48] sm:$0xff] %vm86, %v205
  %306 = vst.msk [vmem:[%s3 + $0x50] sm:$0xff] %vm86, %v210
  %307 = vst.msk [vmem:[%s3 + $0x58] sm:$0xff] %vm86, %v213
  %308 = vst.msk [vmem:[%s3 + $0x60] sm:$0xff] %vm86, %v218
  %309 = vst.msk [vmem:[%s3 + $0x68] sm:$0xff] %vm86, %v221
  %310 = vst.msk [vmem:[%s3 + $0x70] sm:$0xff] %vm86, %v226
  %311 = vst.msk [vmem:[%s3 + $0x78] sm:$0xff] %vm86, %v229
  %312 = vst.msk [vmem:[%s3 + $0x80] sm:$0xff] %vm86, %v234
  %313 = vst.msk [vmem:[%s3 + $0x88] sm:$0xff] %vm86, %v237
  %314 = vst.msk [vmem:[%s3 + $0x90] sm:$0xff] %vm86, %v242
  %315 = vst.msk [vmem:[%s3 + $0x98] sm:$0xff] %vm86, %v245
  %316 = vst.msk [vmem:[%s3 + $0xa0] sm:$0xff] %vm86, %v250
  %317 = vst.msk [vmem:[%s3 + $0xa8] sm:$0xff] %vm86, %v253
  %318 = vst.msk [vmem:[%s3 + $0xb0] sm:$0xff] %vm86, %v258
  %319 = vst.msk [vmem:[%s3 + $0xb8] sm:$0xff] %vm86, %v261
  %320 = vst.msk [vmem:[%s3 + $0xc0] sm:$0xff] %vm86, %v266
  %321 = vst.msk [vmem:[%s3 + $0xc8] sm:$0xff] %vm86, %v269
  %322 = vst.msk [vmem:[%s3 + $0xd0] sm:$0xff] %vm86, %v274
  %323 = vst.msk [vmem:[%s3 + $0xd8] sm:$0xff] %vm86, %v277
  %324 = vst.msk [vmem:[%s3 + $0xe0] sm:$0xff] %vm86, %v282
  %325 = vst.msk [vmem:[%s3 + $0xe8] sm:$0xff] %vm86, %v285
  %326 = vst.msk [vmem:[%s3 + $0xf0] sm:$0xff] %vm86, %v290
  %327 = vst.msk [vmem:[%s3 + $0xf8] sm:$0xff] %vm86, %v293
  // Predicated region
  $region14: #{autoencoder_forward.1} parent=0 // pred_check
    _
  $region15: #{autoencoder_forward.1} parent=0 // pred_check_branch
    %329 = sbr.rel (0) target = $region17
  $region16: #{autoencoder_forward.1} parent=0 // pred_region
    _
  $region17: #{autoencoder_forward.1} parent=0 // pred_fallthru
    _
  // Predicated region
  $region18: #{autoencoder_forward.1} parent=0 // pred_check
    _
  $region19: #{autoencoder_forward.1} parent=0 // pred_check_branch
    %331 = sbr.rel (0) target = $region21
  $region20: #{autoencoder_forward.1} parent=0 // pred_region
    _
  $region21: #{autoencoder_forward.1} parent=0 // pred_fallthru
    _

</llo_original>
